<compile_context>
chip_gen: v7x
topology: tpu7x:2x2x1
jax: 0.10.0
libtpu: 0.0.40
codegen_flags: <defaults>
</compile_context>

<pallas_src>
import functools
import math

import jax
import jax.numpy as jnp
from jax.experimental import pallas as pl
from jax.experimental.pallas import tpu as pltpu

EPS = 1e-15


def _round_up(x, m):
    return ((x + m - 1) // m) * m


# --------------------------------------------------------------------------- #
# Kernel 1: InvariantDense (s -> phi) + pack [phi | v] as a bf16 slab
# --------------------------------------------------------------------------- #
def invariant_dense_kernel(s_ref, v_ref, w1_ref, b1_ref, w2_ref, b2_ref,
                           out_ref, *, feat_dim):
    Fp = feat_dim
    s = s_ref[...]                                                        # (TA, Fp)
    h = jnp.dot(s, w1_ref[...], preferred_element_type=jnp.float32) + b1_ref[...]
    h = h * jax.nn.sigmoid(h)                                             # swish
    phi = (jnp.dot(h, w2_ref[...], preferred_element_type=jnp.float32)
           + b2_ref[...])                                                 # (TA, 3Fp)
    out_ref[:, 0:3 * Fp] = phi.astype(out_ref.dtype)
    out_ref[:, 3 * Fp:6 * Fp] = v_ref[...].astype(out_ref.dtype)


# --------------------------------------------------------------------------- #
# Kernel 2: per-edge message + scatter-add over receiving atoms
# --------------------------------------------------------------------------- #
def message_kernel(phiv_ref, r_ref, snd_ref, rcv_ref, w3_ref, b3_ref, n_ref,
                   out_ref, msg_sc, *, feat_dim, cutoff):
    Fp = feat_dim
    Np = phiv_ref.shape[0]
    TE = r_ref.shape[0]

    # zero this core's accumulator slab on its first edge tile
    @pl.when(pl.program_id(1) == 0)
    def _init():
        out_ref[...] = jnp.zeros_like(out_ref)

    # ---- preprocess_r: distance + unit vectors (one EUP rsqrt) ---------------
    r = r_ref[...]                                                        # (TE, 3)
    d2 = jnp.sum(r * r + EPS, axis=-1, keepdims=True)                     # (TE, 1)
    inv_dist = jax.lax.rsqrt(d2)
    dist = d2 * inv_dist
    unit = r * inv_dist                                                   # (TE, 3)

    # ---- DistanceEmbed: radial basis -> Dense(n_rbf -> 3F) -> cosine envelope -
    n = n_ref[...]                                                        # (1, Rp)
    rbf = jnp.sin((math.pi / cutoff) * n * dist) * inv_dist               # (TE, Rp)
    w_s = jnp.dot(rbf, w3_ref[...], preferred_element_type=jnp.float32) + b3_ref[...]
    env = jnp.where(dist < cutoff,
                    0.5 * (jnp.cos((math.pi / cutoff) * dist) + 1.0),
                    0.0)                                                  # (TE, 1)
    w_s = w_s * env                                                       # (TE, 3Fp)

    # ---- fused gather of [phi | v] at sender atoms (bf16 one-hot matmul) ------
    snd = snd_ref[...]                                                    # (TE, 1) int32
    gmat = (snd == jax.lax.broadcasted_iota(jnp.int32, (TE, Np), 1)
            ).astype(jnp.bfloat16)                                        # (TE, Np)
    pv = jnp.dot(gmat, phiv_ref[...], preferred_element_type=jnp.float32)  # (TE, 6Fp)

    out = pv[:, 0:3 * Fp] * w_s                                           # (TE, 3Fp)
    split_0 = out[:, 0:Fp]                     # gates v_j
    split_1 = out[:, Fp:2 * Fp]                # delta_s_ij
    split_2 = out[:, 2 * Fp:3 * Fp]            # gates unit vector
    v_e = pv[:, 3 * Fp:6 * Fp]                 # gathered v (flattened (3,F))

    # ---- fused per-edge message [delta_s | dv_x | dv_y | dv_z] -> bf16 scratch -
    msg_sc[:, 0:Fp] = split_1.astype(jnp.bfloat16)
    for k in range(3):
        dv_k = unit[:, k:k + 1] * split_2 + split_0 * v_e[:, k * Fp:(k + 1) * Fp]
        msg_sc[:, (k + 1) * Fp:(k + 2) * Fp] = dv_k.astype(jnp.bfloat16)

    # ---- single scatter-add over receiving atoms (bf16 MXU, f32 accumulate) ---
    rcv = rcv_ref[...]                                                    # (1, TE) int32
    smat = (jax.lax.broadcasted_iota(jnp.int32, (Np, TE), 0) == rcv
            ).astype(jnp.bfloat16)                                        # (Np, TE)
    out_ref[...] += jnp.dot(smat, msg_sc[...], preferred_element_type=jnp.float32)


# --------------------------------------------------------------------------- #
# Wrapper
# --------------------------------------------------------------------------- #
def message_block(s_j, v_j, r_ij, nbrs, params, cutoff, *,
                  edge_tile=256, num_core_splits=2):
    """JAX wrapper reproducing MessageBlock.forward (eval mode, dropout = identity)."""
    N, F = s_j.shape
    E = r_ij.shape[0]
    n_rbf = params["n"].shape[-1]

    Fp = _round_up(F, 128)                 # lane-aligned feature dim
    Np = _round_up(max(N, 128), 128)       # MXU-aligned atom dim (K of gather matmul)
    Rp = _round_up(n_rbf, 32)              # padded radial-basis dim
    TE = edge_tile
    TA = 128                               # atom-row tile for the InvariantDense kernel
    f4 = jnp.float32

    total_tiles = _round_up(max(1, -(-E // TE)), num_core_splits)
    tiles_per_split = total_tiles // num_core_splits
    Ep = total_tiles * TE

    # ---- pad atoms / features -------------------------------------------------
    s_pad = jnp.zeros((Np, Fp), f4).at[:N, :F].set(s_j)
    v_t = jnp.transpose(v_j, (0, 2, 1))                                   # (N, 3, F)
    v_pad = jnp.zeros((Np, 3, Fp), f4).at[:N, :, :F].set(v_t).reshape(Np, 3 * Fp)

    # ---- pad edges: padded edges get dist > cutoff -> exactly zero message ----
    r_pad = (jnp.zeros((Ep, 3), f4)
             .at[:, 0].set(2.0 * cutoff + 1.0)
             .at[:E, :].set(r_ij))
    snd = jnp.zeros((Ep, 1), jnp.int32).at[:E, 0].set(nbrs[:, 1])
    rcv = jnp.zeros((1, Ep), jnp.int32).at[0, :E].set(nbrs[:, 0])

    # ---- pad weights, preserving the 3 x F block structure of the "3F" axes ---
    w1p = jnp.zeros((Fp, Fp), f4).at[:F, :F].set(params["w1"])
    b1p = jnp.zeros((1, Fp), f4).at[:, :F].set(params["b1"])
    w2p = (jnp.zeros((Fp, 3, Fp), f4)
           .at[:F, :, :F].set(params["w2"].reshape(F, 3, F))).reshape(Fp, 3 * Fp)
    b2p = (jnp.zeros((1, 3, Fp), f4)
           .at[:, :, :F].set(params["b2"].reshape(1, 3, F))).reshape(1, 3 * Fp)
    w3p = (jnp.zeros((Rp, 3, Fp), f4)
           .at[:n_rbf, :, :F].set(params["w3"].reshape(n_rbf, 3, F))).reshape(Rp, 3 * Fp)
    b3p = (jnp.zeros((1, 3, Fp), f4)
           .at[:, :, :F].set(params["b3"].reshape(1, 3, F))).reshape(1, 3 * Fp)
    n_pad = jnp.zeros((1, Rp), f4).at[:, :n_rbf].set(params["n"])

    # ---- kernel 1: phi = InvariantDense(s), packed with v as bf16 (Np, 6Fp) ---
    phi_v = pl.pallas_call(
        functools.partial(invariant_dense_kernel, feat_dim=Fp),
        out_shape=jax.ShapeDtypeStruct((Np, 6 * Fp), jnp.bfloat16),
        grid=(Np // TA,),
        in_specs=[
            pl.BlockSpec((TA, Fp), lambda i: (i, 0)),
            pl.BlockSpec((TA, 3 * Fp), lambda i: (i, 0)),
            pl.BlockSpec((Fp, Fp), lambda i: (0, 0)),
            pl.BlockSpec((1, Fp), lambda i: (0, 0)),
            pl.BlockSpec((Fp, 3 * Fp), lambda i: (0, 0)),
            pl.BlockSpec((1, 3 * Fp), lambda i: (0, 0)),
        ],
        out_specs=pl.BlockSpec((TA, 6 * Fp), lambda i: (i, 0)),
        compiler_params=pltpu.CompilerParams(dimension_semantics=("parallel",)),
    )(s_pad, v_pad, w1p, b1p, w2p, b2p)

    # ---- kernel 2: edge-tiled message + scatter-add ----------------------------
    def edge_map(c, e):
        return (c * tiles_per_split + e, 0)

    def edge_map_t(c, e):
        return (0, c * tiles_per_split + e)

    def const(shape):
        return pl.BlockSpec(shape, lambda c, e: (0, 0))   # resident across edge steps

    in_specs = [
        const((Np, 6 * Fp)),                              # [phi | v] bf16 slab
        pl.BlockSpec((TE, 3), edge_map),                  # r_ij (edge-tiled)
        pl.BlockSpec((TE, 1), edge_map),                  # sender indices
        pl.BlockSpec((1, TE), edge_map_t),                # receiver indices
        const((Rp, 3 * Fp)), const((1, 3 * Fp)),          # w3, b3
        const((1, Rp)),                                   # radial-basis k's
    ]
    out_spec = pl.BlockSpec((None, Np, 4 * Fp), lambda c, e: (c, 0, 0))

    # ---- VMEM budget (double-buffered inputs, single scratch) + 48 MiB cap ----
    resident = (2 * Np * 6 * Fp * 2                        # phi_v slab (bf16, dbl buf)
                + 2 * 4 * (Rp * 3 * Fp + 3 * Fp + Rp)      # w3/b3/n (dbl buf)
                + 2 * 4 * Np * 4 * Fp                      # output accumulator slab
                + 2 * TE * 4 * Fp)                         # msg scratch (bf16)
    edge_buf = 2 * TE * (4 * 4 + 4) + 2 * TE * 4
    temps = (2 * TE * Np * 2                               # gmat + smat (bf16)
             + 4 * TE * (6 * Fp + 9 * Fp + 4 * Fp + Rp + 16))
    vmem_limit = int(min(resident + edge_buf + temps + (8 << 20), 48 << 20))

    flops = total_tiles * TE * 2 * (Rp * 3 * Fp + Np * 6 * Fp + Np * 4 * Fp)
    cost = pl.CostEstimate(
        flops=int(flops),
        transcendentals=int(total_tiles * TE * (Rp + 4)),
        bytes_accessed=int(2 * Np * 6 * Fp + 4 * (Rp * 3 * Fp + 3 * Fp + Rp)
                           + Ep * 20 + 4 * num_core_splits * Np * 4 * Fp))

    kernel = functools.partial(message_kernel, feat_dim=Fp, cutoff=float(cutoff))

    out = pl.pallas_call(
        kernel,
        out_shape=jax.ShapeDtypeStruct((num_core_splits, Np, 4 * Fp), jnp.float32),
        grid=(num_core_splits, tiles_per_split),
        in_specs=in_specs,
        out_specs=out_spec,
        scratch_shapes=[pltpu.VMEM((TE, 4 * Fp), jnp.bfloat16)],
        compiler_params=pltpu.CompilerParams(
            dimension_semantics=("parallel", "arbitrary"),
            vmem_limit_bytes=vmem_limit),
        cost_estimate=cost,
    )(phi_v, r_pad, snd, rcv, w3p, b3p, n_pad)

    out = jnp.sum(out, axis=0)                             # combine per-core partials
    delta_s = out[:N, :F]
    delta_v = jnp.stack(
        [out[:N, (k + 1) * Fp:(k + 1) * Fp + F] for k in range(3)], axis=-1)  # (N, F, 3)
    return delta_s, delta_v


# --------------------------------------------------------------------------- #
# Pure-JAX reference mirroring the PyTorch MessageBlock (eval mode)
# --------------------------------------------------------------------------- #
def message_block_reference(s_j, v_j, r_ij, nbrs, params, cutoff):
    N, F = s_j.shape
    dist = jnp.sqrt(jnp.sum(r_ij ** 2 + EPS, axis=-1))            # (E,)
    unit = r_ij / dist[:, None]                                    # (E, 3)

    h = s_j @ params["w1"] + params["b1"]
    h = h * jax.nn.sigmoid(h)
    phi = h @ params["w2"] + params["b2"]                          # (N, 3F)
    phi_e = phi[nbrs[:, 1]]                                        # (E, 3F)

    n = params["n"]                                                # (1, n_rbf)
    coef = n * (jnp.pi / cutoff)
    rbf = jnp.sin(coef * dist[:, None]) / dist[:, None]
    rbf = jnp.where(dist[:, None] >= cutoff, 0.0, rbf)
    w_s = rbf @ params["w3"] + params["b3"]
    env = 0.5 * (jnp.cos(jnp.pi * dist / cutoff) + 1.0)
    env = jnp.where(dist >= cutoff, 0.0, env)
    w_s = w_s * env[:, None]

    out = (phi_e * w_s).reshape(-1, 3, F)
    split_0 = out[:, 0, :][..., None]                              # (E, F, 1)
    split_1 = out[:, 1, :]                                         # (E, F)
    split_2 = out[:, 2, :][..., None]                              # (E, F, 1)

    unit_add = split_2 * unit[:, None, :]                          # (E, F, 3)
    delta_v_ij = unit_add + split_0 * v_j[nbrs[:, 1]]              # (E, F, 3)
    delta_s_ij = split_1

    delta_v_i = jnp.zeros((N, F, 3), jnp.float32).at[nbrs[:, 0]].add(delta_v_ij)
    delta_s_i = jnp.zeros((N, F), jnp.float32).at[nbrs[:, 0]].add(delta_s_ij)
    return delta_s_i, delta_v_i


if __name__ == "__main__":
    # Small deterministic problem
    N = 8          # graph_size (num atoms)
    E = 16         # num neighbor pairs
    F = 32         # feat_dim
    n_rbf = 20
    cutoff = 5.0

    key = jax.random.PRNGKey(0)
    k = jax.random.split(key, 10)

    s_j = jax.random.normal(k[0], (N, F), jnp.float32)
    v_j = jax.random.normal(k[1], (N, F, 3), jnp.float32)
    r_ij = jax.random.normal(k[2], (E, 3), jnp.float32) * 1.5
    nbrs = jax.random.randint(k[3], (E, 2), 0, N, jnp.int32)

    # Deterministic synthetic parameters (dropout is identity in eval mode)
    params = {
        "w1": jax.random.normal(k[4], (F, F), jnp.float32) * 0.1,
        "b1": jax.random.normal(k[5], (1, F), jnp.float32) * 0.01,
        "w2": jax.random.normal(k[6], (F, 3 * F), jnp.float32) * 0.1,
        "b2": jax.random.normal(k[7], (1, 3 * F), jnp.float32) * 0.01,
        "w3": jax.random.normal(k[8], (n_rbf, 3 * F), jnp.float32) * 0.1,
        "b3": jax.random.normal(k[9], (1, 3 * F), jnp.float32) * 0.01,
        "n": jnp.arange(1, n_rbf + 1, dtype=jnp.float32)[None, :],  # PainnRadialBasis k's
    }

    ds, dv = message_block(s_j, v_j, r_ij, nbrs, params, cutoff)
    jax.block_until_ready((ds, dv))

    ds_ref, dv_ref = message_block_reference(s_j, v_j, r_ij, nbrs, params, cutoff)
    assert ds.shape == (N, F) and dv.shape == (N, F, 3)
    # bf16 gather/scatter operands -> bf16-level tolerance
    assert jnp.allclose(ds, ds_ref, atol=1e-2, rtol=1e-2)
    assert jnp.allclose(dv, dv_ref, atol=1e-2, rtol=1e-2)

    print("KERNEL_OK")
</pallas_src>

<mosaic_0001>
module attributes {stable_mosaic.version = 11 : i64} {
  func.func @invariant_dense_kernel(%arg0: i32, %arg1: memref<128x128xf32, #tpu.memory_space<vmem>>, %arg2: memref<128x384xf32, #tpu.memory_space<vmem>>, %arg3: memref<128x128xf32, #tpu.memory_space<vmem>>, %arg4: memref<1x128xf32, #tpu.memory_space<vmem>>, %arg5: memref<128x384xf32, #tpu.memory_space<vmem>>, %arg6: memref<1x384xf32, #tpu.memory_space<vmem>>, %arg7: memref<128x768xbf16, #tpu.memory_space<vmem>>) attributes {dimension_semantics = [#tpu.dimension_semantics<parallel>], iteration_bounds = array<i64: 1>, scalar_prefetch = 0 : i64, scratch_operands = 0 : i64, tpu.core_type = #tpu.core_type<tc>, window_params = [{transform_indices = @transform_0, window_bounds = array<i64: 128, 128>}, {transform_indices = @transform_1, window_bounds = array<i64: 128, 384>}, {pipeline_mode = #tpu.pipeline_mode<synchronous>, transform_indices = @transform_2, window_bounds = array<i64: 128, 128>}, {pipeline_mode = #tpu.pipeline_mode<synchronous>, transform_indices = @transform_3, window_bounds = array<i64: 1, 128>}, {pipeline_mode = #tpu.pipeline_mode<synchronous>, transform_indices = @transform_4, window_bounds = array<i64: 128, 384>}, {pipeline_mode = #tpu.pipeline_mode<synchronous>, transform_indices = @transform_5, window_bounds = array<i64: 1, 384>}, {transform_indices = @transform_6, window_bounds = array<i64: 128, 768>}]} {
    %c0 = arith.constant 0 : index
    %c0_0 = arith.constant 0 : index
    %0 = vector.load %arg1[%c0, %c0_0] : memref<128x128xf32, #tpu.memory_space<vmem>>, vector<128x128xf32>
    %c0_1 = arith.constant 0 : index
    %c0_2 = arith.constant 0 : index
    %1 = vector.load %arg3[%c0_1, %c0_2] : memref<128x128xf32, #tpu.memory_space<vmem>>, vector<128x128xf32>
    %cst = arith.constant dense<0.000000e+00> : vector<128x128xf32>
    %2 = tpu.matmul %0, %1, %cst {dimension_numbers = #tpu.dot_dimension_numbers<[1], [0], [0], [1], [0, 0, 1, 1], [], []>} : vector<128x128xf32>, vector<128x128xf32>, vector<128x128xf32> -> vector<128x128xf32>
    %c0_3 = arith.constant 0 : index
    %c0_4 = arith.constant 0 : index
    %3 = vector.load %arg4[%c0_3, %c0_4] : memref<1x128xf32, #tpu.memory_space<vmem>>, vector<1x128xf32>
    %4 = vector.broadcast %3 : vector<1x128xf32> to vector<128x128xf32>
    %5 = arith.addf %2, %4 : vector<128x128xf32>
    %6 = arith.negf %5 : vector<128x128xf32>
    %7 = math.exp %6 : vector<128x128xf32>
    %cst_5 = arith.constant 1.000000e+00 : f32
    %8 = vector.broadcast %cst_5 : f32 to vector<128x128xf32>
    %9 = arith.addf %8, %7 : vector<128x128xf32>
    %10 = arith.divf %8, %9 : vector<128x128xf32>
    %11 = arith.mulf %5, %10 : vector<128x128xf32>
    %c0_6 = arith.constant 0 : index
    %c0_7 = arith.constant 0 : index
    %12 = vector.load %arg5[%c0_6, %c0_7] : memref<128x384xf32, #tpu.memory_space<vmem>>, vector<128x384xf32>
    %cst_8 = arith.constant dense<0.000000e+00> : vector<128x384xf32>
    %13 = tpu.matmul %11, %12, %cst_8 {dimension_numbers = #tpu.dot_dimension_numbers<[1], [0], [0], [1], [0, 0, 1, 1], [], []>} : vector<128x128xf32>, vector<128x384xf32>, vector<128x384xf32> -> vector<128x384xf32>
    %c0_9 = arith.constant 0 : index
    %c0_10 = arith.constant 0 : index
    %14 = vector.load %arg6[%c0_9, %c0_10] : memref<1x384xf32, #tpu.memory_space<vmem>>, vector<1x384xf32>
    %15 = vector.broadcast %14 : vector<1x384xf32> to vector<128x384xf32>
    %16 = arith.addf %13, %15 : vector<128x384xf32>
    %17 = arith.truncf %16 : vector<128x384xf32> to vector<128x384xbf16>
    %c0_11 = arith.constant 0 : index
    %c0_12 = arith.constant 0 : index
    %18 = vector.load %arg7[%c0_11, %c0_12] : memref<128x768xbf16, #tpu.memory_space<vmem>>, vector<128x384xbf16>
    tpu.vector_store %arg7[%c0_11, %c0_12], %17 {strides = array<i32>} : memref<128x768xbf16, #tpu.memory_space<vmem>>, vector<128x384xbf16>,
    %c0_13 = arith.constant 0 : index
    %c0_14 = arith.constant 0 : index
    %19 = vector.load %arg2[%c0_13, %c0_14] : memref<128x384xf32, #tpu.memory_space<vmem>>, vector<128x384xf32>
    %20 = arith.truncf %19 : vector<128x384xf32> to vector<128x384xbf16>
    %c0_15 = arith.constant 0 : index
    %c384 = arith.constant 384 : index
    %21 = vector.load %arg7[%c0_15, %c384] : memref<128x768xbf16, #tpu.memory_space<vmem>>, vector<128x384xbf16>
    tpu.vector_store %arg7[%c0_15, %c384], %20 {strides = array<i32>} : memref<128x768xbf16, #tpu.memory_space<vmem>>, vector<128x384xbf16>,
    return
  }
  func.func @transform_0(%arg0: i32) -> (i32, i32) {
    %c0_i32 = arith.constant 0 : i32
    %c0_i32_0 = arith.constant 0 : i32
    return %arg0, %c0_i32 : i32, i32
  }
  func.func @transform_1(%arg0: i32) -> (i32, i32) {
    %c0_i32 = arith.constant 0 : i32
    %c0_i32_0 = arith.constant 0 : i32
    return %arg0, %c0_i32 : i32, i32
  }
  func.func @transform_2(%arg0: i32) -> (i32, i32) {
    %c0_i32 = arith.constant 0 : i32
    %c0_i32_0 = arith.constant 0 : i32
    %c0_i32_1 = arith.constant 0 : i32
    return %c0_i32, %c0_i32_0 : i32, i32
  }
  func.func @transform_3(%arg0: i32) -> (i32, i32) {
    %c0_i32 = arith.constant 0 : i32
    %c0_i32_0 = arith.constant 0 : i32
    %c0_i32_1 = arith.constant 0 : i32
    return %c0_i32, %c0_i32_0 : i32, i32
  }
  func.func @transform_4(%arg0: i32) -> (i32, i32) {
    %c0_i32 = arith.constant 0 : i32
    %c0_i32_0 = arith.constant 0 : i32
    %c0_i32_1 = arith.constant 0 : i32
    return %c0_i32, %c0_i32_0 : i32, i32
  }
  func.func @transform_5(%arg0: i32) -> (i32, i32) {
    %c0_i32 = arith.constant 0 : i32
    %c0_i32_0 = arith.constant 0 : i32
    %c0_i32_1 = arith.constant 0 : i32
    return %c0_i32, %c0_i32_0 : i32, i32
  }
  func.func @transform_6(%arg0: i32) -> (i32, i32) {
    %c0_i32 = arith.constant 0 : i32
    %c0_i32_0 = arith.constant 0 : i32
    return %arg0, %c0_i32 : i32, i32
  }
}

</mosaic_0001>

<llo_original>
// kernel: tpu_custom_call.1
$region0: #{tpu_custom_call.1}
  #allocation0 [shape = 'u32[]', space=smem, size = 0x4, offset = 0x4, fixed_abs, tag = 'smem constant byte address 0x4 - core index']
  #allocation1 [shape = 'u32[144,128]{1,0:T(1,128)}', space=vmem, size = 0x12000, scoped, tag = 'internal scratch']
  %s0 = inlined_call_operand.hbm [shape: f32[128,128], index: 0, kind: input, shape index: {}]
  %s1 = inlined_call_operand.hbm [shape: f32[128,384], index: 1, kind: input, shape index: {}]
  %s2 = inlined_call_operand.hbm [shape: f32[128,128], index: 2, kind: input, shape index: {}]
  %s3 = inlined_call_operand.vmem [shape: f32[1,128], index: 3, kind: input, shape index: {}]
  %s4 = inlined_call_operand.hbm [shape: f32[128,384], index: 4, kind: input, shape index: {}]
  %s5 = inlined_call_operand.vmem [shape: f32[1,384], index: 5, kind: input, shape index: {}]
  %s6 = inlined_call_operand.hbm [shape: bf16[128,768], index: 6, kind: output, shape index: {}]
  %s7 = sld [smem:[#allocation0]]
  $region50: #{tpu_custom_call.1} parent=0
    _
  %s9 = ssub.s32 1, %s7
  %s10 = scalar_select 0, %s9, %s7
  $region1: #{tpu_custom_call.1} parent=0
    #allocation2 [shape = 'u8[65536]{0}', space=vmem, size = 0x10000, scoped, tag = 'input window, operand 0, single buffered']
    #allocation3 [shape = 's32[1]{0}', space=sflag, size = 0x4, scoped, tag = 'scoped memory for tpu_custom_call.1']
    #allocation4 [shape = 's32[1]{0}', space=sflag, size = 0x4, scoped, tag = 'scoped memory for tpu_custom_call.1']
    #allocation5 [shape = 'u8[196608]{0}', space=vmem, size = 0x30000, scoped, tag = 'input window, operand 1, single buffered']
    #allocation6 [shape = 's32[1]{0}', space=sflag, size = 0x4, scoped, tag = 'scoped memory for tpu_custom_call.1']
    #allocation7 [shape = 'u8[65536]{0}', space=vmem, size = 0x10000, scoped, tag = 'input window, operand 2, single buffered']
    #allocation8 [shape = 'u8[196608]{0}', space=vmem, size = 0x30000, scoped, tag = 'input window, operand 4, single buffered']
    #allocation9 [shape = 's32[1]{0}', space=sflag, size = 0x4, scoped, tag = 'scoped memory for tpu_custom_call.1']
    #allocation10 [shape = 'u8[196608]{0}', space=vmem, size = 0x30000, scoped, tag = 'output window, operand 0, single buffered']
    %11 = vsyncpa [#allocation3], 0
    %12 = vsyncpa [#allocation6], 0
    %13 = vsyncpa [#allocation9], 0
    %14 = vsyncpa [#allocation4], 0
    // Predicated region
    $region2: #{tpu_custom_call.1} parent=1 // pred_check
      _
    $region3: #{tpu_custom_call.1} parent=1 // pred_check_branch
      %16 = sbr.rel (0) target = $region5
    $region4: #{tpu_custom_call.1} parent=1 // pred_region
      %s18 = ssub.s32 2048, 2048
      %19 = vsyncadd [#allocation3], %s18
      %s20 = sshll.u32 [#allocation2], 4
      %s21 = int_to_ptr.vmem [resolvable:$true] %s20
      %26 = dma.hbm_to_vmem [thread:$0]  %s0, 2048, %s21, [#allocation3], 128, 128, 8
    $region5: #{tpu_custom_call.1} parent=1 // pred_fallthru
      _
    // Predicated region
    $region6: #{tpu_custom_call.1} parent=1 // pred_check
      _
    $region7: #{tpu_custom_call.1} parent=1 // pred_check_branch
      %28 = sbr.rel (0) target = $region9
    $region8: #{tpu_custom_call.1} parent=1 // pred_region
      %s30 = ssub.s32 6144, 6144
      %31 = vsyncadd [#allocation6], %s30
      %s32 = sshll.u32 [#allocation5], 4
      %s33 = int_to_ptr.vmem [resolvable:$true] %s32
      %38 = dma.hbm_to_vmem [thread:$0]  %s1, 6144, %s33, [#allocation6], 384, 384, 24
    $region9: #{tpu_custom_call.1} parent=1 // pred_fallthru
      _
    // Predicated region
    $region10: #{tpu_custom_call.1} parent=1 // pred_check
      _
    $region11: #{tpu_custom_call.1} parent=1 // pred_check_branch
      %40 = sbr.rel (0) target = $region13
    $region12: #{tpu_custom_call.1} parent=1 // pred_region
      %s42 = ssub.s32 2048, 2048
      %43 = vsyncadd [#allocation6], %s42
      %s44 = sshll.u32 [#allocation7], 4
      %s45 = int_to_ptr.vmem [resolvable:$true] %s44
      %50 = dma.hbm_to_vmem [thread:$0]  %s2, 2048, %s45, [#allocation6], 128, 128, 8
    $region13: #{tpu_custom_call.1} parent=1 // pred_fallthru
      _
    // Predicated region
    $region14: #{tpu_custom_call.1} parent=1 // pred_check
      _
    $region15: #{tpu_custom_call.1} parent=1 // pred_check_branch
      %52 = sbr.rel (0) target = $region17
    $region16: #{tpu_custom_call.1} parent=1 // pred_region
      _
    $region17: #{tpu_custom_call.1} parent=1 // pred_fallthru
      _
    // Predicated region
    $region18: #{tpu_custom_call.1} parent=1 // pred_check
      _
    $region19: #{tpu_custom_call.1} parent=1 // pred_check_branch
      %54 = sbr.rel (0) target = $region21
    $region20: #{tpu_custom_call.1} parent=1 // pred_region
      %s56 = ssub.s32 6144, 6144
      %57 = vsyncadd [#allocation9], %s56
      %s58 = sshll.u32 [#allocation8], 4
      %s59 = int_to_ptr.vmem [resolvable:$true] %s58
      %64 = dma.hbm_to_vmem [thread:$0]  %s4, 6144, %s59, [#allocation9], 384, 384, 24
    $region21: #{tpu_custom_call.1} parent=1 // pred_fallthru
      _
    // Predicated region
    $region22: #{tpu_custom_call.1} parent=1 // pred_check
      _
    $region23: #{tpu_custom_call.1} parent=1 // pred_check_branch
      %66 = sbr.rel (0) target = $region25
    $region24: #{tpu_custom_call.1} parent=1 // pred_region
      _
    $region25: #{tpu_custom_call.1} parent=1 // pred_fallthru
      _
    // Predicated region
    $region26: #{tpu_custom_call.1} parent=1 // pred_check
      _
    $region27: #{tpu_custom_call.1} parent=1 // pred_check_branch
      %68 = sbr.rel (0) target = $region29
    $region28: #{tpu_custom_call.1} parent=1 // pred_region
      %69 = dma.done [#allocation3], 2048
    $region29: #{tpu_custom_call.1} parent=1 // pred_fallthru
      _
    // Predicated region
    $region30: #{tpu_custom_call.1} parent=1 // pred_check
      _
    $region31: #{tpu_custom_call.1} parent=1 // pred_check_branch
      %71 = sbr.rel (0) target = $region33
    $region32: #{tpu_custom_call.1} parent=1 // pred_region
      %72 = dma.done [#allocation6], 6144
    $region33: #{tpu_custom_call.1} parent=1 // pred_fallthru
      _
    // Predicated region
    $region34: #{tpu_custom_call.1} parent=1 // pred_check
      _
    $region35: #{tpu_custom_call.1} parent=1 // pred_check_branch
      %74 = sbr.rel (0) target = $region37
    $region36: #{tpu_custom_call.1} parent=1 // pred_region
      %75 = dma.done [#allocation6], 2048
    $region37: #{tpu_custom_call.1} parent=1 // pred_fallthru
      _
    // Predicated region
    $region38: #{tpu_custom_call.1} parent=1 // pred_check
      _
    $region39: #{tpu_custom_call.1} parent=1 // pred_check_branch
      %77 = sbr.rel (0) target = $region41
    $region40: #{tpu_custom_call.1} parent=1 // pred_region
      %78 = dma.done [#allocation9], 6144
    $region41: #{tpu_custom_call.1} parent=1 // pred_fallthru
      _
    %v79 = vld [vmem:[#allocation2] sm:$0xff]
    %v80 = vld [vmem:[#allocation2 + $0x8] sm:$0xff]
    %v81 = vld [vmem:[#allocation2 + $0x10] sm:$0xff]
    %v82 = vld [vmem:[#allocation2 + $0x18] sm:$0xff]
    %v83 = vld [vmem:[#allocation2 + $0x20] sm:$0xff]
    %v84 = vld [vmem:[#allocation2 + $0x28] sm:$0xff]
    %v85 = vld [vmem:[#allocation2 + $0x30] sm:$0xff]
    %v86 = vld [vmem:[#allocation2 + $0x38] sm:$0xff]
    %v87 = vld [vmem:[#allocation2 + $0x40] sm:$0xff]
    %v88 = vld [vmem:[#allocation2 + $0x48] sm:$0xff]
    %v89 = vld [vmem:[#allocation2 + $0x50] sm:$0xff]
    %v90 = vld [vmem:[#allocation2 + $0x58] sm:$0xff]
    %v91 = vld [vmem:[#allocation2 + $0x60] sm:$0xff]
    %v92 = vld [vmem:[#allocation2 + $0x68] sm:$0xff]
    %v93 = vld [vmem:[#allocation2 + $0x70] sm:$0xff]
    %v94 = vld [vmem:[#allocation2 + $0x78] sm:$0xff]
    %v95 = vld [vmem:[#allocation7] sm:$0xff]
    %v96 = vld [vmem:[#allocation7 + $0x8] sm:$0xff]
    %v97 = vld [vmem:[#allocation7 + $0x10] sm:$0xff]
    %v98 = vld [vmem:[#allocation7 + $0x18] sm:$0xff]
    %v99 = vld [vmem:[#allocation7 + $0x20] sm:$0xff]
    %v100 = vld [vmem:[#allocation7 + $0x28] sm:$0xff]
    %v101 = vld [vmem:[#allocation7 + $0x30] sm:$0xff]
    %v102 = vld [vmem:[#allocation7 + $0x38] sm:$0xff]
    %v103 = vld [vmem:[#allocation7 + $0x40] sm:$0xff]
    %v104 = vld [vmem:[#allocation7 + $0x48] sm:$0xff]
    %v105 = vld [vmem:[#allocation7 + $0x50] sm:$0xff]
    %v106 = vld [vmem:[#allocation7 + $0x58] sm:$0xff]
    %v107 = vld [vmem:[#allocation7 + $0x60] sm:$0xff]
    %v108 = vld [vmem:[#allocation7 + $0x68] sm:$0xff]
    %v109 = vld [vmem:[#allocation7 + $0x70] sm:$0xff]
    %v110 = vld [vmem:[#allocation7 + $0x78] sm:$0xff]
    %v111 = vld [vmem:[%s3] sm:$0x1]
    %v113 = vlaneseq
    %v114 = vshrl.u32 %v113, 7
    %v115 = vsub.s32 0, %v114
    %v116 = vrot.slane %v111, %v115
    %118 = vmatprep.subr.mxu0 0.0
    %119 = vmatpush1.msra.mxu0 %v95
    %120 = vmatprep.subr.mxu0 0.0
    %121 = vmatpush1.msra.mxu0 %v96
    %122 = vmatprep.subr.mxu0 0.0
    %123 = vmatpush1.msra.mxu0 %v97
    %124 = vmatprep.subr.mxu0 0.0
    %125 = vmatpush1.msra.mxu0 %v98
    %126 = vmatprep.subr.mxu0 0.0
    %127 = vmatpush1.msra.mxu0 %v99
    %128 = vmatprep.subr.mxu0 0.0
    %129 = vmatpush1.msra.mxu0 %v100
    %130 = vmatprep.subr.mxu0 0.0
    %131 = vmatpush1.msra.mxu0 %v101
    %132 = vmatprep.subr.mxu0 0.0
    %133 = vmatpush1.msra.mxu0 %v102
    %134 = vmatprep.subr.mxu0 0.0
    %135 = vmatpush1.msra.mxu0 %v103
    %136 = vmatprep.subr.mxu0 0.0
    %137 = vmatpush1.msra.mxu0 %v104
    %138 = vmatprep.subr.mxu0 0.0
    %139 = vmatpush1.msra.mxu0 %v105
    %140 = vmatprep.subr.mxu0 0.0
    %141 = vmatpush1.msra.mxu0 %v106
    %142 = vmatprep.subr.mxu0 0.0
    %143 = vmatpush1.msra.mxu0 %v107
    %144 = vmatprep.subr.mxu0 0.0
    %145 = vmatpush1.msra.mxu0 %v108
    %146 = vmatprep.subr.mxu0 0.0
    %147 = vmatpush1.msra.mxu0 %v109
    %148 = vmatprep.subr.mxu0 0.0
    %149 = vmatpush1.msra.mxu0 %v110
    %150 = vmatprep.subr.mxu0 0.0
    %151 = vmatpush1.msra.mxu0 0.0
    %152 = vmatprep.subr.mxu0 0.0
    %153 = vmatpush1.msra.mxu0 0.0
    %154 = vmatprep.subr.mxu0 0.0
    %155 = vmatpush1.msra.mxu0 0.0
    %156 = vmatprep.subr.mxu0 0.0
    %157 = vmatpush1.msra.mxu0 0.0
    %158 = vmatprep.subr.mxu0 0.0
    %159 = vmatpush1.msra.mxu0 0.0
    %160 = vmatprep.subr.mxu0 0.0
    %161 = vmatpush1.msra.mxu0 0.0
    %162 = vmatprep.subr.mxu0 0.0
    %163 = vmatpush1.msra.mxu0 0.0
    %164 = vmatprep.subr.mxu0 0.0
    %165 = vmatpush1.msra.mxu0 0.0
    %166 = vmatprep.subr.mxu0 0.0
    %167 = vmatpush1.msra.mxu0 0.0
    %168 = vmatprep.subr.mxu0 0.0
    %169 = vmatpush1.msra.mxu0 0.0
    %170 = vmatprep.subr.mxu0 0.0
    %171 = vmatpush1.msra.mxu0 0.0
    %172 = vmatprep.subr.mxu0 0.0
    %173 = vmatpush1.msra.mxu0 0.0
    %174 = vmatprep.subr.mxu0 0.0
    %175 = vmatpush1.msra.mxu0 0.0
    %176 = vmatprep.subr.mxu0 0.0
    %177 = vmatpush1.msra.mxu0 0.0
    %178 = vmatprep.subr.mxu0 0.0
    %179 = vmatpush1.msra.mxu0 0.0
    %180 = vmatprep.subr.mxu0 0.0
    %181 = vmatpush1.msra.mxu0 0.0
    %182 = vmatprep.mubr.f32.mxu0 0.0
    %183 = vmatmul.mubr.f32.gmra.mrb[0].mxu0 %v79
    %v184 = vpop.f32.mrb[0].mxu0
    %v185 = vadd.f32 %v116, %v184
    %v186 = vpop.f32.mrb[0].mxu0
    %187 = vmatprep.mubr.f32.mxu0 0.0
    %188 = vmatmul.mubr.f32.gmra.mrb[0].mxu0 %v80
    %v189 = vpop.f32.mrb[0].mxu0
    %v190 = vadd.f32 %v116, %v189
    %v191 = vpop.f32.mrb[0].mxu0
    %192 = vmatprep.mubr.f32.mxu0 0.0
    %193 = vmatmul.mubr.f32.gmra.mrb[0].mxu0 %v81
    %v194 = vpop.f32.mrb[0].mxu0
    %v195 = vadd.f32 %v116, %v194
    %v196 = vpop.f32.mrb[0].mxu0
    %197 = vmatprep.mubr.f32.mxu0 0.0
    %198 = vmatmul.mubr.f32.gmra.mrb[0].mxu0 %v82
    %v199 = vpop.f32.mrb[0].mxu0
    %v200 = vadd.f32 %v116, %v199
    %v201 = vpop.f32.mrb[0].mxu0
    %202 = vmatprep.mubr.f32.mxu0 0.0
    %203 = vmatmul.mubr.f32.gmra.mrb[0].mxu0 %v83
    %v204 = vpop.f32.mrb[0].mxu0
    %v205 = vadd.f32 %v116, %v204
    %v206 = vpop.f32.mrb[0].mxu0
    %207 = vmatprep.mubr.f32.mxu0 0.0
    %208 = vmatmul.mubr.f32.gmra.mrb[0].mxu0 %v84
    %v209 = vpop.f32.mrb[0].mxu0
    %v210 = vadd.f32 %v116, %v209
    %v211 = vpop.f32.mrb[0].mxu0
    %212 = vmatprep.mubr.f32.mxu0 0.0
    %213 = vmatmul.mubr.f32.gmra.mrb[0].mxu0 %v85
    %v214 = vpop.f32.mrb[0].mxu0
    %v215 = vadd.f32 %v116, %v214
    %v216 = vpop.f32.mrb[0].mxu0
    %217 = vmatprep.mubr.f32.mxu0 0.0
    %218 = vmatmul.mubr.f32.gmra.mrb[0].mxu0 %v86
    %v219 = vpop.f32.mrb[0].mxu0
    %v220 = vadd.f32 %v116, %v219
    %v221 = vpop.f32.mrb[0].mxu0
    %222 = vmatprep.mubr.f32.mxu0 0.0
    %223 = vmatmul.mubr.f32.gmra.mrb[0].mxu0 %v87
    %v224 = vpop.f32.mrb[0].mxu0
    %v225 = vadd.f32 %v116, %v224
    %v226 = vpop.f32.mrb[0].mxu0
    %227 = vmatprep.mubr.f32.mxu0 0.0
    %228 = vmatmul.mubr.f32.gmra.mrb[0].mxu0 %v88
    %v229 = vpop.f32.mrb[0].mxu0
    %v230 = vadd.f32 %v116, %v229
    %v231 = vpop.f32.mrb[0].mxu0
    %232 = vmatprep.mubr.f32.mxu0 0.0
    %233 = vmatmul.mubr.f32.gmra.mrb[0].mxu0 %v89
    %v234 = vpop.f32.mrb[0].mxu0
    %v235 = vadd.f32 %v116, %v234
    %v236 = vpop.f32.mrb[0].mxu0
    %237 = vmatprep.mubr.f32.mxu0 0.0
    %238 = vmatmul.mubr.f32.gmra.mrb[0].mxu0 %v90
    %v239 = vpop.f32.mrb[0].mxu0
    %v240 = vadd.f32 %v116, %v239
    %v241 = vpop.f32.mrb[0].mxu0
    %242 = vmatprep.mubr.f32.mxu0 0.0
    %243 = vmatmul.mubr.f32.gmra.mrb[0].mxu0 %v91
    %v244 = vpop.f32.mrb[0].mxu0
    %v245 = vadd.f32 %v116, %v244
    %v246 = vpop.f32.mrb[0].mxu0
    %247 = vmatprep.mubr.f32.mxu0 0.0
    %248 = vmatmul.mubr.f32.gmra.mrb[0].mxu0 %v92
    %v249 = vpop.f32.mrb[0].mxu0
    %v250 = vadd.f32 %v116, %v249
    %v251 = vpop.f32.mrb[0].mxu0
    %252 = vmatprep.mubr.f32.mxu0 0.0
    %253 = vmatmul.mubr.f32.gmra.mrb[0].mxu0 %v93
    %v254 = vpop.f32.mrb[0].mxu0
    %v255 = vadd.f32 %v116, %v254
    %v256 = vpop.f32.mrb[0].mxu0
    %257 = vmatprep.mubr.f32.mxu0 0.0
    %258 = vmatmul.mubr.f32.gmra.mrb[0].mxu0 %v94
    %v259 = vpop.f32.mrb[0].mxu0
    %v260 = vadd.f32 %v116, %v259
    %v261 = vpop.f32.mrb[0].mxu0
    %262 = vdwg.mxu0
    %v263 = vxor.u32 %v185, 2147483648
    %v264 = vxor.u32 %v190, 2147483648
    %v265 = vxor.u32 %v195, 2147483648
    %v266 = vxor.u32 %v200, 2147483648
    %v267 = vxor.u32 %v205, 2147483648
    %v268 = vxor.u32 %v210, 2147483648
    %v269 = vxor.u32 %v215, 2147483648
    %v270 = vxor.u32 %v220, 2147483648
    %v271 = vxor.u32 %v225, 2147483648
    %v272 = vxor.u32 %v230, 2147483648
    %v273 = vxor.u32 %v235, 2147483648
    %v274 = vxor.u32 %v240, 2147483648
    %v275 = vxor.u32 %v245, 2147483648
    %v276 = vxor.u32 %v250, 2147483648
    %v277 = vxor.u32 %v255, 2147483648
    %v278 = vxor.u32 %v260, 2147483648
    %v279 = vmul.f32 %v263, 1.442695
    %v280 = vpow.pop %v279
    %v281 = vmul.f32 %v264, 1.442695
    %v282 = vpow.pop %v281
    %v283 = vmul.f32 %v265, 1.442695
    %v284 = vpow.pop %v283
    %v285 = vmul.f32 %v266, 1.442695
    %v286 = vpow.pop %v285
    %v287 = vmul.f32 %v267, 1.442695
    %v288 = vpow.pop %v287
    %v289 = vmul.f32 %v268, 1.442695
    %v290 = vpow.pop %v289
    %v291 = vmul.f32 %v269, 1.442695
    %v292 = vpow.pop %v291
    %v293 = vmul.f32 %v270, 1.442695
    %v294 = vpow.pop %v293
    %v295 = vmul.f32 %v271, 1.442695
    %v296 = vpow.pop %v295
    %v297 = vmul.f32 %v272, 1.442695
    %v298 = vpow.pop %v297
    %v299 = vmul.f32 %v273, 1.442695
    %v300 = vpow.pop %v299
    %v301 = vmul.f32 %v274, 1.442695
    %v302 = vpow.pop %v301
    %v303 = vmul.f32 %v275, 1.442695
    %v304 = vpow.pop %v303
    %v305 = vmul.f32 %v276, 1.442695
    %v306 = vpow.pop %v305
    %v307 = vmul.f32 %v277, 1.442695
    %v308 = vpow.pop %v307
    %v309 = vmul.f32 %v278, 1.442695
    %v310 = vpow.pop %v309
    %v311 = vadd.f32 %v280, 1.0
    %v312 = vadd.f32 %v282, 1.0
    %v313 = vadd.f32 %v284, 1.0
    %v314 = vadd.f32 %v286, 1.0
    %v315 = vadd.f32 %v288, 1.0
    %v316 = vadd.f32 %v290, 1.0
    %v317 = vadd.f32 %v292, 1.0
    %v318 = vadd.f32 %v294, 1.0
    %v319 = vadd.f32 %v296, 1.0
    %v320 = vadd.f32 %v298, 1.0
    %v321 = vadd.f32 %v300, 1.0
    %v322 = vadd.f32 %v302, 1.0
    %v323 = vadd.f32 %v304, 1.0
    %v324 = vadd.f32 %v306, 1.0
    %v325 = vadd.f32 %v308, 1.0
    %v326 = vadd.f32 %v310, 1.0
    %v327 = vrcp.pop %v311
    %v328 = vmul.f32 1.0, %v327
    %v329 = vrcp.pop %v312
    %v330 = vmul.f32 1.0, %v329
    %v331 = vrcp.pop %v313
    %v332 = vmul.f32 1.0, %v331
    %v333 = vrcp.pop %v314
    %v334 = vmul.f32 1.0, %v333
    %v335 = vrcp.pop %v315
    %v336 = vmul.f32 1.0, %v335
    %v337 = vrcp.pop %v316
    %v338 = vmul.f32 1.0, %v337
    %v339 = vrcp.pop %v317
    %v340 = vmul.f32 1.0, %v339
    %v341 = vrcp.pop %v318
    %v342 = vmul.f32 1.0, %v341
    %v343 = vrcp.pop %v319
    %v344 = vmul.f32 1.0, %v343
    %v345 = vrcp.pop %v320
    %v346 = vmul.f32 1.0, %v345
    %v347 = vrcp.pop %v321
    %v348 = vmul.f32 1.0, %v347
    %v349 = vrcp.pop %v322
    %v350 = vmul.f32 1.0, %v349
    %v351 = vrcp.pop %v323
    %v352 = vmul.f32 1.0, %v351
    %v353 = vrcp.pop %v324
    %v354 = vmul.f32 1.0, %v353
    %v355 = vrcp.pop %v325
    %v356 = vmul.f32 1.0, %v355
    %v357 = vrcp.pop %v326
    %v358 = vmul.f32 1.0, %v357
    %v359 = vmul.f32 %v185, %v328
    %v360 = vmul.f32 %v190, %v330
    %v361 = vmul.f32 %v195, %v332
    %v362 = vmul.f32 %v200, %v334
    %v363 = vmul.f32 %v205, %v336
    %v364 = vmul.f32 %v210, %v338
    %v365 = vmul.f32 %v215, %v340
    %v366 = vmul.f32 %v220, %v342
    %v367 = vmul.f32 %v225, %v344
    %v368 = vmul.f32 %v230, %v346
    %v369 = vmul.f32 %v235, %v348
    %v370 = vmul.f32 %v240, %v350
    %v371 = vmul.f32 %v245, %v352
    %v372 = vmul.f32 %v250, %v354
    %v373 = vmul.f32 %v255, %v356
    %v374 = vmul.f32 %v260, %v358
    %v375 = vld [vmem:[#allocation8] sm:$0xff]
    %v376 = vld [vmem:[#allocation8 + $0x8] sm:$0xff]
    %v377 = vld [vmem:[#allocation8 + $0x10] sm:$0xff]
    %v378 = vld [vmem:[#allocation8 + $0x18] sm:$0xff]
    %v379 = vld [vmem:[#allocation8 + $0x20] sm:$0xff]
    %v380 = vld [vmem:[#allocation8 + $0x28] sm:$0xff]
    %v381 = vld [vmem:[#allocation8 + $0x30] sm:$0xff]
    %v382 = vld [vmem:[#allocation8 + $0x38] sm:$0xff]
    %v383 = vld [vmem:[#allocation8 + $0x40] sm:$0xff]
    %v384 = vld [vmem:[#allocation8 + $0x48] sm:$0xff]
    %v385 = vld [vmem:[#allocation8 + $0x50] sm:$0xff]
    %v386 = vld [vmem:[#allocation8 + $0x58] sm:$0xff]
    %v387 = vld [vmem:[#allocation8 + $0x60] sm:$0xff]
    %v388 = vld [vmem:[#allocation8 + $0x68] sm:$0xff]
    %v389 = vld [vmem:[#allocation8 + $0x70] sm:$0xff]
    %v390 = vld [vmem:[#allocation8 + $0x78] sm:$0xff]
    %v391 = vld [vmem:[#allocation8 + $0x80] sm:$0xff]
    %v392 = vld [vmem:[#allocation8 + $0x88] sm:$0xff]
    %v393 = vld [vmem:[#allocation8 + $0x90] sm:$0xff]
    %v394 = vld [vmem:[#allocation8 + $0x98] sm:$0xff]
    %v395 = vld [vmem:[#allocation8 + $0xa0] sm:$0xff]
    %v396 = vld [vmem:[#allocation8 + $0xa8] sm:$0xff]
    %v397 = vld [vmem:[#allocation8 + $0xb0] sm:$0xff]
    %v398 = vld [vmem:[#allocation8 + $0xb8] sm:$0xff]
    %v399 = vld [vmem:[#allocation8 + $0xc0] sm:$0xff]
    %v400 = vld [vmem:[#allocation8 + $0xc8] sm:$0xff]
    %v401 = vld [vmem:[#allocation8 + $0xd0] sm:$0xff]
    %v402 = vld [vmem:[#allocation8 + $0xd8] sm:$0xff]
    %v403 = vld [vmem:[#allocation8 + $0xe0] sm:$0xff]
    %v404 = vld [vmem:[#allocation8 + $0xe8] sm:$0xff]
    %v405 = vld [vmem:[#allocation8 + $0xf0] sm:$0xff]
    %v406 = vld [vmem:[#allocation8 + $0xf8] sm:$0xff]
    %v407 = vld [vmem:[#allocation8 + $0x100] sm:$0xff]
    %v408 = vld [vmem:[#allocation8 + $0x108] sm:$0xff]
    %v409 = vld [vmem:[#allocation8 + $0x110] sm:$0xff]
    %v410 = vld [vmem:[#allocation8 + $0x118] sm:$0xff]
    %v411 = vld [vmem:[#allocation8 + $0x120] sm:$0xff]
    %v412 = vld [vmem:[#allocation8 + $0x128] sm:$0xff]
    %v413 = vld [vmem:[#allocation8 + $0x130] sm:$0xff]
    %v414 = vld [vmem:[#allocation8 + $0x138] sm:$0xff]
    %v415 = vld [vmem:[#allocation8 + $0x140] sm:$0xff]
    %v416 = vld [vmem:[#allocation8 + $0x148] sm:$0xff]
    %v417 = vld [vmem:[#allocation8 + $0x150] sm:$0xff]
    %v418 = vld [vmem:[#allocation8 + $0x158] sm:$0xff]
    %v419 = vld [vmem:[#allocation8 + $0x160] sm:$0xff]
    %v420 = vld [vmem:[#allocation8 + $0x168] sm:$0xff]
    %v421 = vld [vmem:[#allocation8 + $0x170] sm:$0xff]
    %v422 = vld [vmem:[#allocation8 + $0x178] sm:$0xff]
    %v423 = vld [vmem:[%s5] sm:$0x7]
    %v425 = vlaneseq
    %v426 = vshrl.u32 %v425, 7
    %v427 = vsub.s32 0, %v426
    %v428 = vrot.slane %v423, %v427
    %v429 = vlaneseq
    %v430 = vshrl.u32 %v429, 7
    %v431 = vsub.s32 1, %v430
    %v432 = vrot.slane %v423, %v431
    %v433 = vlaneseq
    %v434 = vshrl.u32 %v433, 7
    %v435 = vsub.s32 2, %v434
    %v436 = vrot.slane %v423, %v435
    %440 = vmatprep.subr.mxu0 %v376
    %441 = vmatpush1.msra.mxu0 %v375
    %442 = vmatprep.subr.mxu0 %v379
    %443 = vmatpush1.msra.mxu0 %v378
    %444 = vmatprep.subr.mxu0 %v382
    %445 = vmatpush1.msra.mxu0 %v381
    %446 = vmatprep.subr.mxu0 %v385
    %447 = vmatpush1.msra.mxu0 %v384
    %448 = vmatprep.subr.mxu0 %v388
    %449 = vmatpush1.msra.mxu0 %v387
    %450 = vmatprep.subr.mxu0 %v391
    %451 = vmatpush1.msra.mxu0 %v390
    %452 = vmatprep.subr.mxu0 %v394
    %453 = vmatpush1.msra.mxu0 %v393
    %454 = vmatprep.subr.mxu0 %v397
    %455 = vmatpush1.msra.mxu0 %v396
    %456 = vmatprep.subr.mxu0 %v400
    %457 = vmatpush1.msra.mxu0 %v399
    %458 = vmatprep.subr.mxu0 %v403
    %459 = vmatpush1.msra.mxu0 %v402
    %460 = vmatprep.subr.mxu0 %v406
    %461 = vmatpush1.msra.mxu0 %v405
    %462 = vmatprep.subr.mxu0 %v409
    %463 = vmatpush1.msra.mxu0 %v408
    %464 = vmatprep.subr.mxu0 %v412
    %465 = vmatpush1.msra.mxu0 %v411
    %466 = vmatprep.subr.mxu0 %v415
    %467 = vmatpush1.msra.mxu0 %v414
    %468 = vmatprep.subr.mxu0 %v418
    %469 = vmatpush1.msra.mxu0 %v417
    %470 = vmatprep.subr.mxu0 %v421
    %471 = vmatpush1.msra.mxu0 %v420
    %472 = vmatprep.subr.mxu0 0.0
    %473 = vmatpush1.msra.mxu0 0.0
    %474 = vmatprep.subr.mxu0 0.0
    %475 = vmatpush1.msra.mxu0 0.0
    %476 = vmatprep.subr.mxu0 0.0
    %477 = vmatpush1.msra.mxu0 0.0
    %478 = vmatprep.subr.mxu0 0.0
    %479 = vmatpush1.msra.mxu0 0.0
    %480 = vmatprep.subr.mxu0 0.0
    %481 = vmatpush1.msra.mxu0 0.0
    %482 = vmatprep.subr.mxu0 0.0
    %483 = vmatpush1.msra.mxu0 0.0
    %484 = vmatprep.subr.mxu0 0.0
    %485 = vmatpush1.msra.mxu0 0.0
    %486 = vmatprep.subr.mxu0 0.0
    %487 = vmatpush1.msra.mxu0 0.0
    %488 = vmatprep.subr.mxu0 0.0
    %489 = vmatpush1.msra.mxu0 0.0
    %490 = vmatprep.subr.mxu0 0.0
    %491 = vmatpush1.msra.mxu0 0.0
    %492 = vmatprep.subr.mxu0 0.0
    %493 = vmatpush1.msra.mxu0 0.0
    %494 = vmatprep.subr.mxu0 0.0
    %495 = vmatpush1.msra.mxu0 0.0
    %496 = vmatprep.subr.mxu0 0.0
    %497 = vmatpush1.msra.mxu0 0.0
    %498 = vmatprep.subr.mxu0 0.0
    %499 = vmatpush1.msra.mxu0 0.0
    %500 = vmatprep.subr.mxu0 0.0
    %501 = vmatpush1.msra.mxu0 0.0
    %502 = vmatprep.subr.mxu0 0.0
    %503 = vmatpush1.msra.mxu0 0.0
    %504 = vmatprep.mubr.f32.mxu0 0.0
    %505 = vmatmul.mubr.f32.gmra.mrb[0].mxu0 %v359
    %v506 = vpop.f32.mrb[0].mxu0
    %v507 = vadd.f32 %v428, %v506
    %v508 = vpop.f32.mrb[0].mxu0
    %v509 = vadd.f32 %v432, %v508
    %510 = vmatprep.mubr.f32.mxu0 0.0
    %511 = vmatmul.mubr.f32.gmra.mrb[0].mxu0 %v360
    %v512 = vpop.f32.mrb[0].mxu0
    %v513 = vadd.f32 %v428, %v512
    %v514 = vpop.f32.mrb[0].mxu0
    %v515 = vadd.f32 %v432, %v514
    %516 = vmatprep.mubr.f32.mxu0 0.0
    %517 = vmatmul.mubr.f32.gmra.mrb[0].mxu0 %v361
    %v518 = vpop.f32.mrb[0].mxu0
    %v519 = vadd.f32 %v428, %v518
    %v520 = vpop.f32.mrb[0].mxu0
    %v521 = vadd.f32 %v432, %v520
    %522 = vmatprep.mubr.f32.mxu0 0.0
    %523 = vmatmul.mubr.f32.gmra.mrb[0].mxu0 %v362
    %v524 = vpop.f32.mrb[0].mxu0
    %v525 = vadd.f32 %v428, %v524
    %v526 = vpop.f32.mrb[0].mxu0
    %v527 = vadd.f32 %v432, %v526
    %528 = vmatprep.mubr.f32.mxu0 0.0
    %529 = vmatmul.mubr.f32.gmra.mrb[0].mxu0 %v363
    %v530 = vpop.f32.mrb[0].mxu0
    %v531 = vadd.f32 %v428, %v530
    %v532 = vpop.f32.mrb[0].mxu0
    %v533 = vadd.f32 %v432, %v532
    %534 = vmatprep.mubr.f32.mxu0 0.0
    %535 = vmatmul.mubr.f32.gmra.mrb[0].mxu0 %v364
    %v536 = vpop.f32.mrb[0].mxu0
    %v537 = vadd.f32 %v428, %v536
    %v538 = vpop.f32.mrb[0].mxu0
    %v539 = vadd.f32 %v432, %v538
    %540 = vmatprep.mubr.f32.mxu0 0.0
    %541 = vmatmul.mubr.f32.gmra.mrb[0].mxu0 %v365
    %v542 = vpop.f32.mrb[0].mxu0
    %v543 = vadd.f32 %v428, %v542
    %v544 = vpop.f32.mrb[0].mxu0
    %v545 = vadd.f32 %v432, %v544
    %546 = vmatprep.mubr.f32.mxu0 0.0
    %547 = vmatmul.mubr.f32.gmra.mrb[0].mxu0 %v366
    %v548 = vpop.f32.mrb[0].mxu0
    %v549 = vadd.f32 %v428, %v548
    %v550 = vpop.f32.mrb[0].mxu0
    %v551 = vadd.f32 %v432, %v550
    %552 = vmatprep.mubr.f32.mxu0 0.0
    %553 = vmatmul.mubr.f32.gmra.mrb[0].mxu0 %v367
    %v554 = vpop.f32.mrb[0].mxu0
    %v555 = vadd.f32 %v428, %v554
    %v556 = vpop.f32.mrb[0].mxu0
    %v557 = vadd.f32 %v432, %v556
    %558 = vmatprep.mubr.f32.mxu0 0.0
    %559 = vmatmul.mubr.f32.gmra.mrb[0].mxu0 %v368
    %v560 = vpop.f32.mrb[0].mxu0
    %v561 = vadd.f32 %v428, %v560
    %v562 = vpop.f32.mrb[0].mxu0
    %v563 = vadd.f32 %v432, %v562
    %564 = vmatprep.mubr.f32.mxu0 0.0
    %565 = vmatmul.mubr.f32.gmra.mrb[0].mxu0 %v369
    %v566 = vpop.f32.mrb[0].mxu0
    %v567 = vadd.f32 %v428, %v566
    %v568 = vpop.f32.mrb[0].mxu0
    %v569 = vadd.f32 %v432, %v568
    %570 = vmatprep.mubr.f32.mxu0 0.0
    %571 = vmatmul.mubr.f32.gmra.mrb[0].mxu0 %v370
    %v572 = vpop.f32.mrb[0].mxu0
    %v573 = vadd.f32 %v428, %v572
    %v574 = vpop.f32.mrb[0].mxu0
    %v575 = vadd.f32 %v432, %v574
    %576 = vmatprep.mubr.f32.mxu0 0.0
    %577 = vmatmul.mubr.f32.gmra.mrb[0].mxu0 %v371
    %v578 = vpop.f32.mrb[0].mxu0
    %v579 = vadd.f32 %v428, %v578
    %v580 = vpop.f32.mrb[0].mxu0
    %v581 = vadd.f32 %v432, %v580
    %582 = vmatprep.mubr.f32.mxu0 0.0
    %583 = vmatmul.mubr.f32.gmra.mrb[0].mxu0 %v372
    %v584 = vpop.f32.mrb[0].mxu0
    %v585 = vadd.f32 %v428, %v584
    %v586 = vpop.f32.mrb[0].mxu0
    %v587 = vadd.f32 %v432, %v586
    %588 = vmatprep.mubr.f32.mxu0 0.0
    %589 = vmatmul.mubr.f32.gmra.mrb[0].mxu0 %v373
    %v590 = vpop.f32.mrb[0].mxu0
    %v591 = vadd.f32 %v428, %v590
    %v592 = vpop.f32.mrb[0].mxu0
    %v593 = vadd.f32 %v432, %v592
    %594 = vmatprep.mubr.f32.mxu0 0.0
    %595 = vmatmul.mubr.f32.gmra.mrb[0].mxu0 %v374
    %v596 = vpop.f32.mrb[0].mxu0
    %v597 = vadd.f32 %v428, %v596
    %v598 = vpop.f32.mrb[0].mxu0
    %v599 = vadd.f32 %v432, %v598
    %600 = vdwg.mxu0
    %601 = vmatprep.subr.mxu0 0.0
    %602 = vmatpush1.msra.mxu0 %v377
    %603 = vmatprep.subr.mxu0 0.0
    %604 = vmatpush1.msra.mxu0 %v380
    %605 = vmatprep.subr.mxu0 0.0
    %606 = vmatpush1.msra.mxu0 %v383
    %607 = vmatprep.subr.mxu0 0.0
    %608 = vmatpush1.msra.mxu0 %v386
    %609 = vmatprep.subr.mxu0 0.0
    %610 = vmatpush1.msra.mxu0 %v389
    %611 = vmatprep.subr.mxu0 0.0
    %612 = vmatpush1.msra.mxu0 %v392
    %613 = vmatprep.subr.mxu0 0.0
    %614 = vmatpush1.msra.mxu0 %v395
    %615 = vmatprep.subr.mxu0 0.0
    %616 = vmatpush1.msra.mxu0 %v398
    %617 = vmatprep.subr.mxu0 0.0
    %618 = vmatpush1.msra.mxu0 %v401
    %619 = vmatprep.subr.mxu0 0.0
    %620 = vmatpush1.msra.mxu0 %v404
    %621 = vmatprep.subr.mxu0 0.0
    %622 = vmatpush1.msra.mxu0 %v407
    %623 = vmatprep.subr.mxu0 0.0
    %624 = vmatpush1.msra.mxu0 %v410
    %625 = vmatprep.subr.mxu0 0.0
    %626 = vmatpush1.msra.mxu0 %v413
    %627 = vmatprep.subr.mxu0 0.0
    %628 = vmatpush1.msra.mxu0 %v416
    %629 = vmatprep.subr.mxu0 0.0
    %630 = vmatpush1.msra.mxu0 %v419
    %631 = vmatprep.subr.mxu0 0.0
    %632 = vmatpush1.msra.mxu0 %v422
    %633 = vmatprep.subr.mxu0 0.0
    %634 = vmatpush1.msra.mxu0 0.0
    %635 = vmatprep.subr.mxu0 0.0
    %636 = vmatpush1.msra.mxu0 0.0
    %637 = vmatprep.subr.mxu0 0.0
    %638 = vmatpush1.msra.mxu0 0.0
    %639 = vmatprep.subr.mxu0 0.0
    %640 = vmatpush1.msra.mxu0 0.0
    %641 = vmatprep.subr.mxu0 0.0
    %642 = vmatpush1.msra.mxu0 0.0
    %643 = vmatprep.subr.mxu0 0.0
    %644 = vmatpush1.msra.mxu0 0.0
    %645 = vmatprep.subr.mxu0 0.0
    %646 = vmatpush1.msra.mxu0 0.0
    %647 = vmatprep.subr.mxu0 0.0
    %648 = vmatpush1.msra.mxu0 0.0
    %649 = vmatprep.subr.mxu0 0.0
    %650 = vmatpush1.msra.mxu0 0.0
    %651 = vmatprep.subr.mxu0 0.0
    %652 = vmatpush1.msra.mxu0 0.0
    %653 = vmatprep.subr.mxu0 0.0
    %654 = vmatpush1.msra.mxu0 0.0
    %655 = vmatprep.subr.mxu0 0.0
    %656 = vmatpush1.msra.mxu0 0.0
    %657 = vmatprep.subr.mxu0 0.0
    %658 = vmatpush1.msra.mxu0 0.0
    %659 = vmatprep.subr.mxu0 0.0
    %660 = vmatpush1.msra.mxu0 0.0
    %661 = vmatprep.subr.mxu0 0.0
    %662 = vmatpush1.msra.mxu0 0.0
    %663 = vmatprep.subr.mxu0 0.0
    %664 = vmatpush1.msra.mxu0 0.0
    %665 = vmatprep.mubr.f32.mxu0 0.0
    %666 = vmatmul.mubr.f32.gmra.mrb[0].mxu0 %v359
    %v667 = vpop.f32.mrb[0].mxu0
    %v668 = vadd.f32 %v436, %v667
    %v669 = vpop.f32.mrb[0].mxu0
    %670 = vmatprep.mubr.f32.mxu0 0.0
    %671 = vmatmul.mubr.f32.gmra.mrb[0].mxu0 %v360
    %v672 = vpop.f32.mrb[0].mxu0
    %v673 = vadd.f32 %v436, %v672
    %v674 = vpop.f32.mrb[0].mxu0
    %675 = vmatprep.mubr.f32.mxu0 0.0
    %676 = vmatmul.mubr.f32.gmra.mrb[0].mxu0 %v361
    %v677 = vpop.f32.mrb[0].mxu0
    %v678 = vadd.f32 %v436, %v677
    %v679 = vpop.f32.mrb[0].mxu0
    %680 = vmatprep.mubr.f32.mxu0 0.0
    %681 = vmatmul.mubr.f32.gmra.mrb[0].mxu0 %v362
    %v682 = vpop.f32.mrb[0].mxu0
    %v683 = vadd.f32 %v436, %v682
    %v684 = vpop.f32.mrb[0].mxu0
    %685 = vmatprep.mubr.f32.mxu0 0.0
    %686 = vmatmul.mubr.f32.gmra.mrb[0].mxu0 %v363
    %v687 = vpop.f32.mrb[0].mxu0
    %v688 = vadd.f32 %v436, %v687
    %v689 = vpop.f32.mrb[0].mxu0
    %690 = vmatprep.mubr.f32.mxu0 0.0
    %691 = vmatmul.mubr.f32.gmra.mrb[0].mxu0 %v364
    %v692 = vpop.f32.mrb[0].mxu0
    %v693 = vadd.f32 %v436, %v692
    %v694 = vpop.f32.mrb[0].mxu0
    %695 = vmatprep.mubr.f32.mxu0 0.0
    %696 = vmatmul.mubr.f32.gmra.mrb[0].mxu0 %v365
    %v697 = vpop.f32.mrb[0].mxu0
    %v698 = vadd.f32 %v436, %v697
    %v699 = vpop.f32.mrb[0].mxu0
    %700 = vmatprep.mubr.f32.mxu0 0.0
    %701 = vmatmul.mubr.f32.gmra.mrb[0].mxu0 %v366
    %v702 = vpop.f32.mrb[0].mxu0
    %v703 = vadd.f32 %v436, %v702
    %v704 = vpop.f32.mrb[0].mxu0
    %705 = vmatprep.mubr.f32.mxu0 0.0
    %706 = vmatmul.mubr.f32.gmra.mrb[0].mxu0 %v367
    %v707 = vpop.f32.mrb[0].mxu0
    %v708 = vadd.f32 %v436, %v707
    %v709 = vpop.f32.mrb[0].mxu0
    %710 = vmatprep.mubr.f32.mxu0 0.0
    %711 = vmatmul.mubr.f32.gmra.mrb[0].mxu0 %v368
    %v712 = vpop.f32.mrb[0].mxu0
    %v713 = vadd.f32 %v436, %v712
    %v714 = vpop.f32.mrb[0].mxu0
    %715 = vmatprep.mubr.f32.mxu0 0.0
    %716 = vmatmul.mubr.f32.gmra.mrb[0].mxu0 %v369
    %v717 = vpop.f32.mrb[0].mxu0
    %v718 = vadd.f32 %v436, %v717
    %v719 = vpop.f32.mrb[0].mxu0
    %720 = vmatprep.mubr.f32.mxu0 0.0
    %721 = vmatmul.mubr.f32.gmra.mrb[0].mxu0 %v370
    %v722 = vpop.f32.mrb[0].mxu0
    %v723 = vadd.f32 %v436, %v722
    %v724 = vpop.f32.mrb[0].mxu0
    %725 = vmatprep.mubr.f32.mxu0 0.0
    %726 = vmatmul.mubr.f32.gmra.mrb[0].mxu0 %v371
    %v727 = vpop.f32.mrb[0].mxu0
    %v728 = vadd.f32 %v436, %v727
    %v729 = vpop.f32.mrb[0].mxu0
    %730 = vmatprep.mubr.f32.mxu0 0.0
    %731 = vmatmul.mubr.f32.gmra.mrb[0].mxu0 %v372
    %v732 = vpop.f32.mrb[0].mxu0
    %v733 = vadd.f32 %v436, %v732
    %v734 = vpop.f32.mrb[0].mxu0
    %735 = vmatprep.mubr.f32.mxu0 0.0
    %736 = vmatmul.mubr.f32.gmra.mrb[0].mxu0 %v373
    %v737 = vpop.f32.mrb[0].mxu0
    %v738 = vadd.f32 %v436, %v737
    %v739 = vpop.f32.mrb[0].mxu0
    %740 = vmatprep.mubr.f32.mxu0 0.0
    %741 = vmatmul.mubr.f32.gmra.mrb[0].mxu0 %v374
    %v742 = vpop.f32.mrb[0].mxu0
    %v743 = vadd.f32 %v436, %v742
    %v744 = vpop.f32.mrb[0].mxu0
    %745 = vdwg.mxu0
    %v746 = vpack.c.bf16 %v513, %v507
    %v747 = vpack.c.bf16 %v515, %v509
    %v748 = vpack.c.bf16 %v673, %v668
    %v749 = vpack.c.bf16 %v525, %v519
    %v750 = vpack.c.bf16 %v527, %v521
    %v751 = vpack.c.bf16 %v683, %v678
    %v752 = vpack.c.bf16 %v537, %v531
    %v753 = vpack.c.bf16 %v539, %v533
    %v754 = vpack.c.bf16 %v693, %v688
    %v755 = vpack.c.bf16 %v549, %v543
    %v756 = vpack.c.bf16 %v551, %v545
    %v757 = vpack.c.bf16 %v703, %v698
    %v758 = vpack.c.bf16 %v561, %v555
    %v759 = vpack.c.bf16 %v563, %v557
    %v760 = vpack.c.bf16 %v713, %v708
    %v761 = vpack.c.bf16 %v573, %v567
    %v762 = vpack.c.bf16 %v575, %v569
    %v763 = vpack.c.bf16 %v723, %v718
    %v764 = vpack.c.bf16 %v585, %v579
    %v765 = vpack.c.bf16 %v587, %v581
    %v766 = vpack.c.bf16 %v733, %v728
    %v767 = vpack.c.bf16 %v597, %v591
    %v768 = vpack.c.bf16 %v599, %v593
    %v769 = vpack.c.bf16 %v743, %v738
    %v794 = vunpack.c.l.b16 %v746
    %v795 = vunpack.c.l.b16 %v747
    %v796 = vunpack.c.l.b16 %v748
    %v797 = vunpack.c.h.b16 %v746
    %v798 = vunpack.c.h.b16 %v747
    %v799 = vunpack.c.h.b16 %v748
    %v800 = vunpack.c.l.b16 %v749
    %v801 = vunpack.c.l.b16 %v750
    %v802 = vunpack.c.l.b16 %v751
    %v803 = vunpack.c.h.b16 %v749
    %v804 = vunpack.c.h.b16 %v750
    %v805 = vunpack.c.h.b16 %v751
    %v806 = vunpack.c.l.b16 %v752
    %v807 = vunpack.c.l.b16 %v753
    %v808 = vunpack.c.l.b16 %v754
    %v809 = vunpack.c.h.b16 %v752
    %v810 = vunpack.c.h.b16 %v753
    %v811 = vunpack.c.h.b16 %v754
    %v812 = vunpack.c.l.b16 %v755
    %v813 = vunpack.c.l.b16 %v756
    %v814 = vunpack.c.l.b16 %v757
    %v815 = vunpack.c.h.b16 %v755
    %v816 = vunpack.c.h.b16 %v756
    %v817 = vunpack.c.h.b16 %v757
    %v818 = vunpack.c.l.b16 %v758
    %v819 = vunpack.c.l.b16 %v759
    %v820 = vunpack.c.l.b16 %v760
    %v821 = vunpack.c.h.b16 %v758
    %v822 = vunpack.c.h.b16 %v759
    %v823 = vunpack.c.h.b16 %v760
    %v824 = vunpack.c.l.b16 %v761
    %v825 = vunpack.c.l.b16 %v762
    %v826 = vunpack.c.l.b16 %v763
    %v827 = vunpack.c.h.b16 %v761
    %v828 = vunpack.c.h.b16 %v762
    %v829 = vunpack.c.h.b16 %v763
    %v830 = vunpack.c.l.b16 %v764
    %v831 = vunpack.c.l.b16 %v765
    %v832 = vunpack.c.l.b16 %v766
    %v833 = vunpack.c.h.b16 %v764
    %v834 = vunpack.c.h.b16 %v765
    %v835 = vunpack.c.h.b16 %v766
    %v836 = vunpack.c.l.b16 %v767
    %v837 = vunpack.c.l.b16 %v768
    %v838 = vunpack.c.l.b16 %v769
    %v839 = vunpack.c.h.b16 %v767
    %v840 = vunpack.c.h.b16 %v768
    %v841 = vunpack.c.h.b16 %v769
    %v842 = vpack.c.b16 %v795, %v794
    %v843 = vpack.c.b16 %v796, %v796
    %v844 = vpack.c.b16 %v798, %v797
    %v845 = vpack.c.b16 %v799, %v799
    %v846 = vpack.c.b16 %v801, %v800
    %v847 = vpack.c.b16 %v802, %v802
    %v848 = vpack.c.b16 %v804, %v803
    %v849 = vpack.c.b16 %v805, %v805
    %v850 = vpack.c.b16 %v807, %v806
    %v851 = vpack.c.b16 %v808, %v808
    %v852 = vpack.c.b16 %v810, %v809
    %v853 = vpack.c.b16 %v811, %v811
    %v854 = vpack.c.b16 %v813, %v812
    %v855 = vpack.c.b16 %v814, %v814
    %v856 = vpack.c.b16 %v816, %v815
    %v857 = vpack.c.b16 %v817, %v817
    %v858 = vpack.c.b16 %v819, %v818
    %v859 = vpack.c.b16 %v820, %v820
    %v860 = vpack.c.b16 %v822, %v821
    %v861 = vpack.c.b16 %v823, %v823
    %v862 = vpack.c.b16 %v825, %v824
    %v863 = vpack.c.b16 %v826, %v826
    %v864 = vpack.c.b16 %v828, %v827
    %v865 = vpack.c.b16 %v829, %v829
    %v866 = vpack.c.b16 %v831, %v830
    %v867 = vpack.c.b16 %v832, %v832
    %v868 = vpack.c.b16 %v834, %v833
    %v869 = vpack.c.b16 %v835, %v835
    %v870 = vpack.c.b16 %v837, %v836
    %v871 = vpack.c.b16 %v838, %v838
    %v872 = vpack.c.b16 %v840, %v839
    %v873 = vpack.c.b16 %v841, %v841
    %906 = vst [vmem:[#allocation10] sm:$0xff] %v842
    %907 = vst [vmem:[#allocation10 + $0x8] sm:$0xf] %v843
    %908 = vst [vmem:[#allocation10 + $0x18] sm:$0xff] %v844
    %909 = vst [vmem:[#allocation10 + $0x20] sm:$0xf] %v845
    %910 = vst [vmem:[#allocation10 + $0x30] sm:$0xff] %v846
    %911 = vst [vmem:[#allocation10 + $0x38] sm:$0xf] %v847
    %912 = vst [vmem:[#allocation10 + $0x48] sm:$0xff] %v848
    %913 = vst [vmem:[#allocation10 + $0x50] sm:$0xf] %v849
    %914 = vst [vmem:[#allocation10 + $0x60] sm:$0xff] %v850
    %915 = vst [vmem:[#allocation10 + $0x68] sm:$0xf] %v851
    %916 = vst [vmem:[#allocation10 + $0x78] sm:$0xff] %v852
    %917 = vst [vmem:[#allocation10 + $0x80] sm:$0xf] %v853
    %918 = vst [vmem:[#allocation10 + $0x90] sm:$0xff] %v854
    %919 = vst [vmem:[#allocation10 + $0x98] sm:$0xf] %v855
    %920 = vst [vmem:[#allocation10 + $0xa8] sm:$0xff] %v856
    %921 = vst [vmem:[#allocation10 + $0xb0] sm:$0xf] %v857
    %922 = vst [vmem:[#allocation10 + $0xc0] sm:$0xff] %v858
    %923 = vst [vmem:[#allocation10 + $0xc8] sm:$0xf] %v859
    %924 = vst [vmem:[#allocation10 + $0xd8] sm:$0xff] %v860
    %925 = vst [vmem:[#allocation10 + $0xe0] sm:$0xf] %v861
    %926 = vst [vmem:[#allocation10 + $0xf0] sm:$0xff] %v862
    %927 = vst [vmem:[#allocation10 + $0xf8] sm:$0xf] %v863
    %928 = vst [vmem:[#allocation10 + $0x108] sm:$0xff] %v864
    %929 = vst [vmem:[#allocation10 + $0x110] sm:$0xf] %v865
    %930 = vst [vmem:[#allocation10 + $0x120] sm:$0xff] %v866
    %931 = vst [vmem:[#allocation10 + $0x128] sm:$0xf] %v867
    %932 = vst [vmem:[#allocation10 + $0x138] sm:$0xff] %v868
    %933 = vst [vmem:[#allocation10 + $0x140] sm:$0xf] %v869
    %934 = vst [vmem:[#allocation10 + $0x150] sm:$0xff] %v870
    %935 = vst [vmem:[#allocation10 + $0x158] sm:$0xf] %v871
    %936 = vst [vmem:[#allocation10 + $0x168] sm:$0xff] %v872
    %937 = vst [vmem:[#allocation10 + $0x170] sm:$0xf] %v873
    %v938 = vld [vmem:[#allocation5] sm:$0xff]
    %v939 = vld [vmem:[#allocation5 + $0x8] sm:$0xff]
    %v940 = vld [vmem:[#allocation5 + $0x10] sm:$0xff]
    %v941 = vld [vmem:[#allocation5 + $0x18] sm:$0xff]
    %v942 = vld [vmem:[#allocation5 + $0x20] sm:$0xff]
    %v943 = vld [vmem:[#allocation5 + $0x28] sm:$0xff]
    %v944 = vld [vmem:[#allocation5 + $0x30] sm:$0xff]
    %v945 = vld [vmem:[#allocation5 + $0x38] sm:$0xff]
    %v946 = vld [vmem:[#allocation5 + $0x40] sm:$0xff]
    %v947 = vld [vmem:[#allocation5 + $0x48] sm:$0xff]
    %v948 = vld [vmem:[#allocation5 + $0x50] sm:$0xff]
    %v949 = vld [vmem:[#allocation5 + $0x58] sm:$0xff]
    %v950 = vld [vmem:[#allocation5 + $0x60] sm:$0xff]
    %v951 = vld [vmem:[#allocation5 + $0x68] sm:$0xff]
    %v952 = vld [vmem:[#allocation5 + $0x70] sm:$0xff]
    %v953 = vld [vmem:[#allocation5 + $0x78] sm:$0xff]
    %v954 = vld [vmem:[#allocation5 + $0x80] sm:$0xff]
    %v955 = vld [vmem:[#allocation5 + $0x88] sm:$0xff]
    %v956 = vld [vmem:[#allocation5 + $0x90] sm:$0xff]
    %v957 = vld [vmem:[#allocation5 + $0x98] sm:$0xff]
    %v958 = vld [vmem:[#allocation5 + $0xa0] sm:$0xff]
    %v959 = vld [vmem:[#allocation5 + $0xa8] sm:$0xff]
    %v960 = vld [vmem:[#allocation5 + $0xb0] sm:$0xff]
    %v961 = vld [vmem:[#allocation5 + $0xb8] sm:$0xff]
    %v962 = vld [vmem:[#allocation5 + $0xc0] sm:$0xff]
    %v963 = vld [vmem:[#allocation5 + $0xc8] sm:$0xff]
    %v964 = vld [vmem:[#allocation5 + $0xd0] sm:$0xff]
    %v965 = vld [vmem:[#allocation5 + $0xd8] sm:$0xff]
    %v966 = vld [vmem:[#allocation5 + $0xe0] sm:$0xff]
    %v967 = vld [vmem:[#allocation5 + $0xe8] sm:$0xff]
    %v968 = vld [vmem:[#allocation5 + $0xf0] sm:$0xff]
    %v969 = vld [vmem:[#allocation5 + $0xf8] sm:$0xff]
    %v970 = vld [vmem:[#allocation5 + $0x100] sm:$0xff]
    %v971 = vld [vmem:[#allocation5 + $0x108] sm:$0xff]
    %v972 = vld [vmem:[#allocation5 + $0x110] sm:$0xff]
    %v973 = vld [vmem:[#allocation5 + $0x118] sm:$0xff]
    %v974 = vld [vmem:[#allocation5 + $0x120] sm:$0xff]
    %v975 = vld [vmem:[#allocation5 + $0x128] sm:$0xff]
    %v976 = vld [vmem:[#allocation5 + $0x130] sm:$0xff]
    %v977 = vld [vmem:[#allocation5 + $0x138] sm:$0xff]
    %v978 = vld [vmem:[#allocation5 + $0x140] sm:$0xff]
    %v979 = vld [vmem:[#allocation5 + $0x148] sm:$0xff]
    %v980 = vld [vmem:[#allocation5 + $0x150] sm:$0xff]
    %v981 = vld [vmem:[#allocation5 + $0x158] sm:$0xff]
    %v982 = vld [vmem:[#allocation5 + $0x160] sm:$0xff]
    %v983 = vld [vmem:[#allocation5 + $0x168] sm:$0xff]
    %v984 = vld [vmem:[#allocation5 + $0x170] sm:$0xff]
    %v985 = vld [vmem:[#allocation5 + $0x178] sm:$0xff]
    %v986 = vpack.c.bf16 %v941, %v938
    %v987 = vpack.c.bf16 %v942, %v939
    %v988 = vpack.c.bf16 %v943, %v940
    %v989 = vpack.c.bf16 %v947, %v944
    %v990 = vpack.c.bf16 %v948, %v945
    %v991 = vpack.c.bf16 %v949, %v946
    %v992 = vpack.c.bf16 %v953, %v950
    %v993 = vpack.c.bf16 %v954, %v951
    %v994 = vpack.c.bf16 %v955, %v952
    %v995 = vpack.c.bf16 %v959, %v956
    %v996 = vpack.c.bf16 %v960, %v957
    %v997 = vpack.c.bf16 %v961, %v958
    %v998 = vpack.c.bf16 %v965, %v962
    %v999 = vpack.c.bf16 %v966, %v963
    %v1000 = vpack.c.bf16 %v967, %v964
    %v1001 = vpack.c.bf16 %v971, %v968
    %v1002 = vpack.c.bf16 %v972, %v969
    %v1003 = vpack.c.bf16 %v973, %v970
    %v1004 = vpack.c.bf16 %v977, %v974
    %v1005 = vpack.c.bf16 %v978, %v975
    %v1006 = vpack.c.bf16 %v979, %v976
    %v1007 = vpack.c.bf16 %v983, %v980
    %v1008 = vpack.c.bf16 %v984, %v981
    %v1009 = vpack.c.bf16 %v985, %v982
    %v1034 = vunpack.c.l.b16 %v986
    %v1035 = vunpack.c.l.b16 %v987
    %v1036 = vunpack.c.l.b16 %v988
    %v1037 = vunpack.c.h.b16 %v986
    %v1038 = vunpack.c.h.b16 %v987
    %v1039 = vunpack.c.h.b16 %v988
    %v1040 = vunpack.c.l.b16 %v989
    %v1041 = vunpack.c.l.b16 %v990
    %v1042 = vunpack.c.l.b16 %v991
    %v1043 = vunpack.c.h.b16 %v989
    %v1044 = vunpack.c.h.b16 %v990
    %v1045 = vunpack.c.h.b16 %v991
    %v1046 = vunpack.c.l.b16 %v992
    %v1047 = vunpack.c.l.b16 %v993
    %v1048 = vunpack.c.l.b16 %v994
    %v1049 = vunpack.c.h.b16 %v992
    %v1050 = vunpack.c.h.b16 %v993
    %v1051 = vunpack.c.h.b16 %v994
    %v1052 = vunpack.c.l.b16 %v995
    %v1053 = vunpack.c.l.b16 %v996
    %v1054 = vunpack.c.l.b16 %v997
    %v1055 = vunpack.c.h.b16 %v995
    %v1056 = vunpack.c.h.b16 %v996
    %v1057 = vunpack.c.h.b16 %v997
    %v1058 = vunpack.c.l.b16 %v998
    %v1059 = vunpack.c.l.b16 %v999
    %v1060 = vunpack.c.l.b16 %v1000
    %v1061 = vunpack.c.h.b16 %v998
    %v1062 = vunpack.c.h.b16 %v999
    %v1063 = vunpack.c.h.b16 %v1000
    %v1064 = vunpack.c.l.b16 %v1001
    %v1065 = vunpack.c.l.b16 %v1002
    %v1066 = vunpack.c.l.b16 %v1003
    %v1067 = vunpack.c.h.b16 %v1001
    %v1068 = vunpack.c.h.b16 %v1002
    %v1069 = vunpack.c.h.b16 %v1003
    %v1070 = vunpack.c.l.b16 %v1004
    %v1071 = vunpack.c.l.b16 %v1005
    %v1072 = vunpack.c.l.b16 %v1006
    %v1073 = vunpack.c.h.b16 %v1004
    %v1074 = vunpack.c.h.b16 %v1005
    %v1075 = vunpack.c.h.b16 %v1006
    %v1076 = vunpack.c.l.b16 %v1007
    %v1077 = vunpack.c.l.b16 %v1008
    %v1078 = vunpack.c.l.b16 %v1009
    %v1079 = vunpack.c.h.b16 %v1007
    %v1080 = vunpack.c.h.b16 %v1008
    %v1081 = vunpack.c.h.b16 %v1009
    %v1082 = vpack.c.b16 %v1035, %v1034
    %v1083 = vpack.c.b16 %v1036, %v1036
    %v1084 = vpack.c.b16 %v1038, %v1037
    %v1085 = vpack.c.b16 %v1039, %v1039
    %v1086 = vpack.c.b16 %v1041, %v1040
    %v1087 = vpack.c.b16 %v1042, %v1042
    %v1088 = vpack.c.b16 %v1044, %v1043
    %v1089 = vpack.c.b16 %v1045, %v1045
    %v1090 = vpack.c.b16 %v1047, %v1046
    %v1091 = vpack.c.b16 %v1048, %v1048
    %v1092 = vpack.c.b16 %v1050, %v1049
    %v1093 = vpack.c.b16 %v1051, %v1051
    %v1094 = vpack.c.b16 %v1053, %v1052
    %v1095 = vpack.c.b16 %v1054, %v1054
    %v1096 = vpack.c.b16 %v1056, %v1055
    %v1097 = vpack.c.b16 %v1057, %v1057
    %v1098 = vpack.c.b16 %v1059, %v1058
    %v1099 = vpack.c.b16 %v1060, %v1060
    %v1100 = vpack.c.b16 %v1062, %v1061
    %v1101 = vpack.c.b16 %v1063, %v1063
    %v1102 = vpack.c.b16 %v1065, %v1064
    %v1103 = vpack.c.b16 %v1066, %v1066
    %v1104 = vpack.c.b16 %v1068, %v1067
    %v1105 = vpack.c.b16 %v1069, %v1069
    %v1106 = vpack.c.b16 %v1071, %v1070
    %v1107 = vpack.c.b16 %v1072, %v1072
    %v1108 = vpack.c.b16 %v1074, %v1073
    %v1109 = vpack.c.b16 %v1075, %v1075
    %v1110 = vpack.c.b16 %v1077, %v1076
    %v1111 = vpack.c.b16 %v1078, %v1078
    %v1112 = vpack.c.b16 %v1080, %v1079
    %v1113 = vpack.c.b16 %v1081, %v1081
    %1146 = vst [vmem:[#allocation10 + $0xc] sm:$0xff] %v1082
    %1147 = vst [vmem:[#allocation10 + $0x14] sm:$0xf] %v1083
    %1148 = vst [vmem:[#allocation10 + $0x24] sm:$0xff] %v1084
    %1149 = vst [vmem:[#allocation10 + $0x2c] sm:$0xf] %v1085
    %1150 = vst [vmem:[#allocation10 + $0x3c] sm:$0xff] %v1086
    %1151 = vst [vmem:[#allocation10 + $0x44] sm:$0xf] %v1087
    %1152 = vst [vmem:[#allocation10 + $0x54] sm:$0xff] %v1088
    %1153 = vst [vmem:[#allocation10 + $0x5c] sm:$0xf] %v1089
    %1154 = vst [vmem:[#allocation10 + $0x6c] sm:$0xff] %v1090
    %1155 = vst [vmem:[#allocation10 + $0x74] sm:$0xf] %v1091
    %1156 = vst [vmem:[#allocation10 + $0x84] sm:$0xff] %v1092
    %1157 = vst [vmem:[#allocation10 + $0x8c] sm:$0xf] %v1093
    %1158 = vst [vmem:[#allocation10 + $0x9c] sm:$0xff] %v1094
    %1159 = vst [vmem:[#allocation10 + $0xa4] sm:$0xf] %v1095
    %1160 = vst [vmem:[#allocation10 + $0xb4] sm:$0xff] %v1096
    %1161 = vst [vmem:[#allocation10 + $0xbc] sm:$0xf] %v1097
    %1162 = vst [vmem:[#allocation10 + $0xcc] sm:$0xff] %v1098
    %1163 = vst [vmem:[#allocation10 + $0xd4] sm:$0xf] %v1099
    %1164 = vst [vmem:[#allocation10 + $0xe4] sm:$0xff] %v1100
    %1165 = vst [vmem:[#allocation10 + $0xec] sm:$0xf] %v1101
    %1166 = vst [vmem:[#allocation10 + $0xfc] sm:$0xff] %v1102
    %1167 = vst [vmem:[#allocation10 + $0x104] sm:$0xf] %v1103
    %1168 = vst [vmem:[#allocation10 + $0x114] sm:$0xff] %v1104
    %1169 = vst [vmem:[#allocation10 + $0x11c] sm:$0xf] %v1105
    %1170 = vst [vmem:[#allocation10 + $0x12c] sm:$0xff] %v1106
    %1171 = vst [vmem:[#allocation10 + $0x134] sm:$0xf] %v1107
    %1172 = vst [vmem:[#allocation10 + $0x144] sm:$0xff] %v1108
    %1173 = vst [vmem:[#allocation10 + $0x14c] sm:$0xf] %v1109
    %1174 = vst [vmem:[#allocation10 + $0x15c] sm:$0xff] %v1110
    %1175 = vst [vmem:[#allocation10 + $0x164] sm:$0xf] %v1111
    %1176 = vst [vmem:[#allocation10 + $0x174] sm:$0xff] %v1112
    %1177 = vst [vmem:[#allocation10 + $0x17c] sm:$0xf] %v1113
    // Predicated region
    $region42: #{tpu_custom_call.1} parent=1 // pred_check
      _
    $region43: #{tpu_custom_call.1} parent=1 // pred_check_branch
      %1179 = sbr.rel (0) target = $region45
    $region44: #{tpu_custom_call.1} parent=1 // pred_region
      %s1181 = ssub.s32 6144, 6144
      %1182 = vsyncadd [#allocation4], %s1181
      %s1183 = sshll.u32 [#allocation10], 4
      %s1184 = int_to_ptr.vmem [resolvable:$true] %s1183
      %1189 = dma.vmem_to_hbm [thread:$0]  %s1184, 6144, %s6, [#allocation4], 384, 384, 24
    $region45: #{tpu_custom_call.1} parent=1 // pred_fallthru
      _
    // Predicated region
    $region46: #{tpu_custom_call.1} parent=1 // pred_check
      _
    $region47: #{tpu_custom_call.1} parent=1 // pred_check_branch
      %1191 = sbr.rel (0) target = $region49
    $region48: #{tpu_custom_call.1} parent=1 // pred_region
      %1192 = dma.done [#allocation4], 6144
    $region49: #{tpu_custom_call.1} parent=1 // pred_fallthru
      _
    %1193 = vsyncpa [#allocation3], 1
    %1194 = vsyncpa [#allocation6], 1
    %1195 = vsyncpa [#allocation9], 1
    %1196 = vsyncpa [#allocation4], 1

</llo_original>
